<compile_context>
chip_gen: v6e
topology: v6e:2x2x1
jax: 0.10.0
libtpu: 0.0.40
codegen_flags: <defaults>
</compile_context>

<pallas_src>
import functools

import jax
import jax.numpy as jnp
from jax import lax
from jax.experimental import pallas as pl
from jax.experimental.pallas import tpu as pltpu


def _round_up(x, m):
    return ((x + m - 1) // m) * m


_TN = (((0,), (0,)), ((), ()))   # contract sublane dims: (R,1)^T @ (R,E) -> (1,E)
_NT = (((1,), (1,)), ((), ()))   # contract lane dims:    (R,E) @ (1,E)^T -> (R,1)


def _graph_model_kernel(rbias_ref, feat_ref, wmat_ref, avec_ref, o_ref,
                        *, e_pad, nn_pad, n_neighbor, n_item):
    f32 = jnp.float32
    feat = feat_ref[...]                      # (R, E_pad): [self, 0.., neigh.., items..]

    # One fused projection for BOTH GAT layers: [feat @ W_n | feat @ W_i].
    h = jnp.dot(feat, wmat_ref[...], preferred_element_type=f32)   # (R, 2*E_pad)
    h_n = h[:, :e_pad]
    h_i = h[:, e_pad:]
    hs_n = h[0:1, :e_pad]                     # projected self row under W_n
    hs_i = h[0:1, e_pad:]                     # projected self row under W_i

    R = feat.shape[0]
    row = lax.broadcasted_iota(jnp.int32, (R, 1), 0)
    valid_n = jnp.logical_and(row >= 8, row < 8 + n_neighbor)
    valid_i = jnp.logical_and(row >= 8 + nn_pad, row < 8 + nn_pad + n_item)

    def attend(h_blk, hs_blk, a_neigh, a_self, valid):
        # Neighbor-side score on the MXU ((R,E)x(1,E)^T), self-side via a single VPU reduce.
        s_neigh = lax.dot_general(h_blk, a_neigh, _NT, preferred_element_type=f32)  # (R,1)
        s_self = jnp.sum(hs_blk * a_self, keepdims=True)                            # (1,1)
        e = s_self + s_neigh
        e = jnp.where(e > 0, e, 0.2 * e)                    # LeakyReLU(0.2)
        e = jnp.where(valid, e, -1e30)                      # mask pad / foreign rows
        e = e - jnp.max(e, axis=0, keepdims=True)
        p = jnp.exp(e) * valid.astype(f32)
        denom = jnp.maximum(jnp.sum(p, axis=0, keepdims=True), 1e-30)  # empty-set guard
        alpha = p / denom                                   # softmax over valid neighbors
        # Softmax-weighted sum of projected neighbors on the MXU: (R,1)^T @ (R,E).
        return lax.dot_general(alpha, h_blk, _TN, preferred_element_type=f32)       # (1,E)

    f_n = attend(h_n, hs_n, avec_ref[0:1, :], avec_ref[2:3, :], valid_n)
    f_i = attend(h_i, hs_i, avec_ref[1:2, :], avec_ref[3:4, :], valid_i)

    fs = feat[0:1, :]                         # un-projected self features (padded)
    cf = avec_ref[4:5, :]                     # c[:E]

    # e_x = c[:E].f_x + c[E:].relation_x ; the relation halves are precomputed scalars.
    e_n = jnp.sum(cf * f_n, keepdims=True) + rbias_ref[0]
    e_i = jnp.sum(cf * f_i, keepdims=True) + rbias_ref[1]
    e_s = jnp.sum(cf * fs, keepdims=True) + rbias_ref[2]

    m = jnp.maximum(jnp.maximum(e_n, e_i), e_s)
    w_n = jnp.exp(e_n - m)
    w_i = jnp.exp(e_i - m)
    w_s = jnp.exp(e_s - m)
    inv = 1.0 / (w_n + w_i + w_s)             # exact divide (tolerance-sensitive)
    o_ref[...] = (w_s * inv * fs + w_n * inv * f_n + w_i * inv * f_i).astype(o_ref.dtype)


def pack_params(params, embed_size):
    """One-time padding/packing of all parameters into lane-dense persistent slabs."""
    E = embed_size
    E_pad = _round_up(E, 128)
    f32 = jnp.float32
    hi = jax.lax.Precision.HIGHEST

    # Weight slab: [W_neighbor | W_item], zero-padded to (E_pad, 2*E_pad).
    wmat = jnp.zeros((E_pad, 2 * E_pad), f32)
    wmat = wmat.at[:E, :E].set(params["W_neighbor"].astype(f32))
    wmat = wmat.at[:E, E_pad:E_pad + E].set(params["W_item"].astype(f32))

    # Vector slab (8 rows): attention halves + c[:E]; padded lanes stay zero.
    avec = jnp.zeros((8, E_pad), f32)
    avec = avec.at[0, :E].set(params["a_neighbor"][E:].astype(f32))   # neighbor half
    avec = avec.at[1, :E].set(params["a_item"][E:].astype(f32))
    avec = avec.at[2, :E].set(params["a_neighbor"][:E].astype(f32))   # self half
    avec = avec.at[3, :E].set(params["a_item"][:E].astype(f32))
    avec = avec.at[4, :E].set(params["c"][:E].astype(f32))

    # c[E:].relation_x are constants of the model -> precompute once, pass via SMEM.
    cr = params["c"][E:].astype(f32)
    rbias = jnp.stack([
        jnp.dot(cr, params["relation_neighbor"].astype(f32), precision=hi),
        jnp.dot(cr, params["relation_item"].astype(f32), precision=hi),
        jnp.dot(cr, params["relation_self"].astype(f32), precision=hi),
    ]).astype(f32)
    return dict(wmat=wmat, avec=avec, rbias=rbias)


@jax.jit
def _forward_impl(feature_self, feature_neighbor, feature_item, wmat, avec, rbias):
    f32 = jnp.float32
    E = feature_self.shape[-1]
    E_pad = wmat.shape[0]
    n_neighbor = feature_neighbor.shape[0]
    n_item = feature_item.shape[0]
    nn_pad = _round_up(max(n_neighbor, 1), 8)
    ni_pad = _round_up(max(n_item, 1), 8)
    R = 8 + nn_pad + ni_pad

    # Single per-call feature slab: row 0 = self, rows [8, 8+n_neighbor) = neighbors,
    # rows [8+nn_pad, 8+nn_pad+n_item) = items; everything else zero.  jit fuses the pads.
    feat = jnp.zeros((R, E_pad), f32)
    feat = feat.at[0, :E].set(feature_self.astype(f32))
    feat = feat.at[8:8 + n_neighbor, :E].set(feature_neighbor.astype(f32))
    feat = feat.at[8 + nn_pad:8 + nn_pad + n_item, :E].set(feature_item.astype(f32))

    kernel = functools.partial(
        _graph_model_kernel, e_pad=E_pad, nn_pad=nn_pad,
        n_neighbor=n_neighbor, n_item=n_item)

    flops = (2 * R * E_pad * 2 * E_pad          # fused projection
             + 2 * (2 * R * E_pad)              # score dots
             + 2 * (2 * R * E_pad)              # alpha-weighted sums
             + 12 * R * E_pad)                  # VPU misc
    bytes_accessed = 4 * (R * E_pad + wmat.size + avec.size + rbias.size + E_pad)
    transcendentals = 2 * R + 3

    out = pl.pallas_call(
        kernel,
        out_shape=jax.ShapeDtypeStruct((1, E_pad), f32),
        in_specs=[
            pl.BlockSpec(memory_space=pltpu.MemorySpace.SMEM),   # rbias (3,)
            pl.BlockSpec(memory_space=pltpu.MemorySpace.VMEM),   # feat
            pl.BlockSpec(memory_space=pltpu.MemorySpace.VMEM),   # wmat
            pl.BlockSpec(memory_space=pltpu.MemorySpace.VMEM),   # avec
        ],
        out_specs=pl.BlockSpec(memory_space=pltpu.MemorySpace.VMEM),
        compiler_params=pltpu.CompilerParams(vmem_limit_bytes=32 * 1024 * 1024),
        cost_estimate=pl.CostEstimate(
            flops=int(flops),
            transcendentals=int(transcendentals),
            bytes_accessed=int(bytes_accessed)),
    )(rbias, feat, wmat, avec)
    return out[0, :E]


def graph_model_forward(feature_self, feature_neighbor, feature_item, packed):
    """Fused GraphModel.forward (tensor-item branch). Returns user_embedding (E,)."""
    return _forward_impl(feature_self, feature_neighbor, feature_item,
                         packed["wmat"], packed["avec"], packed["rbias"])


def init_params(key, embed_size):
    """Deterministic init. Relation vectors / c follow the spec's torch.randn;
    GAT internals (undefined in the spec) use scaled normal for numerical sanity."""
    ks = jax.random.split(key, 8)
    scale_w = 1.0 / (embed_size ** 0.5)
    scale_a = 1.0 / ((2 * embed_size) ** 0.5)
    return dict(
        W_neighbor=scale_w * jax.random.normal(ks[0], (embed_size, embed_size), jnp.float32),
        a_neighbor=scale_a * jax.random.normal(ks[1], (2 * embed_size,), jnp.float32),
        W_item=scale_w * jax.random.normal(ks[2], (embed_size, embed_size), jnp.float32),
        a_item=scale_a * jax.random.normal(ks[3], (2 * embed_size,), jnp.float32),
        relation_neighbor=jax.random.normal(ks[4], (embed_size,), jnp.float32),
        relation_item=jax.random.normal(ks[5], (embed_size,), jnp.float32),
        relation_self=jax.random.normal(ks[6], (embed_size,), jnp.float32),
        c=jax.random.normal(ks[7], (2 * embed_size,), jnp.float32),
    )


def graph_model_reference(feature_self, feature_neighbor, feature_item, params):
    """Pure-JAX reference of the same forward pass (high-precision matmuls)."""
    E = feature_self.shape[-1]
    hi = jax.lax.Precision.HIGHEST

    def gat(x_self, x_neigh, W, a):
        hs = jnp.dot(x_self, W, precision=hi)            # (E,)
        hn = jnp.dot(x_neigh, W, precision=hi)           # (N, E)
        e = jnp.dot(hs, a[:E], precision=hi) + jnp.dot(hn, a[E:], precision=hi)
        e = jnp.where(e > 0, e, 0.2 * e)
        alpha = jax.nn.softmax(e)
        return jnp.dot(alpha, hn, precision=hi)          # (E,)

    f_n = gat(feature_self, feature_neighbor, params["W_neighbor"], params["a_neighbor"])
    f_i = gat(feature_self, feature_item, params["W_item"], params["a_item"])
    cf, cr = params["c"][:E], params["c"][E:]
    e_n = jnp.dot(cf, f_n, precision=hi) + jnp.dot(cr, params["relation_neighbor"], precision=hi)
    e_i = jnp.dot(cf, f_i, precision=hi) + jnp.dot(cr, params["relation_item"], precision=hi)
    e_s = jnp.dot(cf, feature_self, precision=hi) + jnp.dot(cr, params["relation_self"], precision=hi)
    r = jax.nn.softmax(jnp.stack([e_n, e_i, e_s]))
    return r[2] * feature_self + r[0] * f_n + r[1] * f_i


if __name__ == "__main__":
    key = jax.random.PRNGKey(0)
    k_fs, k_fn, k_fi, k_p = jax.random.split(key, 4)

    embed_size = 32
    n_neighbor = 8
    n_item = 12

    feature_self = jax.random.normal(k_fs, (embed_size,), jnp.float32)
    feature_neighbor = jax.random.normal(k_fn, (n_neighbor, embed_size), jnp.float32)
    feature_item = jax.random.normal(k_fi, (n_item, embed_size), jnp.float32)
    params = init_params(k_p, embed_size)

    packed = pack_params(params, embed_size)     # one-time pad/pack, NOT per call
    packed = jax.tree_util.tree_map(jax.block_until_ready, packed)

    out = graph_model_forward(feature_self, feature_neighbor, feature_item, packed)
    out = jax.block_until_ready(out)

    ref = graph_model_reference(feature_self, feature_neighbor, feature_item, params)
    assert out.shape == (embed_size,)
    err = float(jnp.max(jnp.abs(out - ref)))
    assert jnp.allclose(out, ref, atol=2e-3, rtol=2e-3), f"max abs err = {err}"

    print("KERNEL_OK")
</pallas_src>

<mosaic_0001>
module attributes {stable_mosaic.version = 11 : i64} {
  func.func @_graph_model_kernel(%arg0: memref<3xf32, #tpu.memory_space<smem>>, %arg1: memref<32x128xf32, #tpu.memory_space<vmem>>, %arg2: memref<128x256xf32, #tpu.memory_space<vmem>>, %arg3: memref<8x128xf32, #tpu.memory_space<vmem>>, %arg4: memref<1x128xf32, #tpu.memory_space<vmem>>) attributes {dimension_semantics = [], scalar_prefetch = 0 : i64, scratch_operands = 0 : i64, tpu.core_type = #tpu.core_type<tc>} {
    %c0 = arith.constant 0 : index
    %c0_0 = arith.constant 0 : index
    %0 = vector.load %arg1[%c0, %c0_0] : memref<32x128xf32, #tpu.memory_space<vmem>>, vector<32x128xf32>
    %c0_1 = arith.constant 0 : index
    %c0_2 = arith.constant 0 : index
    %1 = vector.load %arg2[%c0_1, %c0_2] : memref<128x256xf32, #tpu.memory_space<vmem>>, vector<128x256xf32>
    %cst = arith.constant dense<0.000000e+00> : vector<32x256xf32>
    %2 = tpu.matmul %0, %1, %cst {dimension_numbers = #tpu.dot_dimension_numbers<[1], [0], [0], [1], [0, 0, 1, 1], [], []>} : vector<32x128xf32>, vector<128x256xf32>, vector<32x256xf32> -> vector<32x256xf32>
    %3 = vector.extract_strided_slice %2 {offsets = [0, 0], sizes = [32, 128], strides = [1, 1]} : vector<32x256xf32> to vector<32x128xf32>
    %4 = vector.extract_strided_slice %2 {offsets = [0, 128], sizes = [32, 128], strides = [1, 1]} : vector<32x256xf32> to vector<32x128xf32>
    %5 = vector.extract_strided_slice %2 {offsets = [0, 0], sizes = [1, 128], strides = [1, 1]} : vector<32x256xf32> to vector<1x128xf32>
    %6 = vector.extract_strided_slice %2 {offsets = [0, 128], sizes = [1, 128], strides = [1, 1]} : vector<32x256xf32> to vector<1x128xf32>
    %7 = tpu.iota {dimensions = array<i32: 0>} : vector<32x1xi32>
    %c8_i32 = arith.constant 8 : i32
    %8 = vector.broadcast %c8_i32 : i32 to vector<32x1xi32>
    %9 = arith.cmpi sge, %7, %8 : vector<32x1xi32>
    %c16_i32 = arith.constant 16 : i32
    %10 = vector.broadcast %c16_i32 : i32 to vector<32x1xi32>
    %11 = arith.cmpi slt, %7, %10 : vector<32x1xi32>
    %12 = arith.andi %9, %11 : vector<32x1xi1>
    %c16_i32_3 = arith.constant 16 : i32
    %13 = vector.broadcast %c16_i32_3 : i32 to vector<32x1xi32>
    %14 = arith.cmpi sge, %7, %13 : vector<32x1xi32>
    %c28_i32 = arith.constant 28 : i32
    %15 = vector.broadcast %c28_i32 : i32 to vector<32x1xi32>
    %16 = arith.cmpi slt, %7, %15 : vector<32x1xi32>
    %17 = arith.andi %14, %16 : vector<32x1xi1>
    %c0_4 = arith.constant 0 : index
    %c0_5 = arith.constant 0 : index
    %18 = vector.load %arg3[%c0_4, %c0_5] : memref<8x128xf32, #tpu.memory_space<vmem>>, vector<1x128xf32>
    %c2 = arith.constant 2 : index
    %c0_6 = arith.constant 0 : index
    %19 = vector.load %arg3[%c2, %c0_6] : memref<8x128xf32, #tpu.memory_space<vmem>>, vector<1x128xf32>
    %cst_7 = arith.constant dense<0.000000e+00> : vector<32x1xf32>
    %20 = tpu.matmul %3, %18, %cst_7 {dimension_numbers = #tpu.dot_dimension_numbers<[1], [1], [0], [0], [0, 0, 1, 0], [], []>} : vector<32x128xf32>, vector<1x128xf32>, vector<32x1xf32> -> vector<32x1xf32>
    %21 = arith.mulf %5, %19 : vector<1x128xf32>
    %22 = vector.shape_cast %21 : vector<1x128xf32> to vector<1x1x128xf32>
    %cst_8 = arith.constant dense<0.000000e+00> : vector<1xf32>
    %23 = vector.multi_reduction <add>, %22, %cst_8 [1, 2] : vector<1x1x128xf32> to vector<1xf32>
    %24 = vector.shape_cast %23 : vector<1xf32> to vector<1x1x1xf32>
    %25 = vector.extract %24[0, 0, 0] : f32 from vector<1x1x1xf32>
    %26 = vector.broadcast %25 : f32 to vector<1x1xf32>
    %27 = vector.broadcast %26 : vector<1x1xf32> to vector<32x1xf32>
    %28 = arith.addf %27, %20 : vector<32x1xf32>
    %cst_9 = arith.constant 0.000000e+00 : f32
    %29 = vector.broadcast %cst_9 : f32 to vector<32x1xf32>
    %30 = arith.cmpf ogt, %28, %29 : vector<32x1xf32>
    %cst_10 = arith.constant 2.000000e-01 : f32
    %31 = vector.broadcast %cst_10 : f32 to vector<32x1xf32>
    %32 = arith.mulf %31, %28 : vector<32x1xf32>
    %33 = arith.select %30, %28, %32 : vector<32x1xi1>, vector<32x1xf32>
    %cst_11 = arith.constant -1.000000e+30 : f32
    %34 = vector.broadcast %cst_11 : f32 to vector<32x1xf32>
    %35 = arith.select %12, %33, %34 : vector<32x1xi1>, vector<32x1xf32>
    %cst_12 = arith.constant dense<0xFF800000> : vector<1xf32>
    %36 = vector.multi_reduction <maximumf>, %35, %cst_12 [0] : vector<32x1xf32> to vector<1xf32>
    %37 = vector.shape_cast %36 : vector<1xf32> to vector<1x1xf32>
    %38 = vector.broadcast %37 : vector<1x1xf32> to vector<32x1xf32>
    %39 = arith.subf %35, %38 : vector<32x1xf32>
    %40 = math.exp %39 : vector<32x1xf32>
    %41 = arith.extui %12 : vector<32x1xi1> to vector<32x1xi32>
    %42 = arith.sitofp %41 : vector<32x1xi32> to vector<32x1xf32>
    %43 = arith.mulf %40, %42 : vector<32x1xf32>
    %cst_13 = arith.constant dense<0.000000e+00> : vector<1xf32>
    %44 = vector.multi_reduction <add>, %43, %cst_13 [0] : vector<32x1xf32> to vector<1xf32>
    %45 = vector.shape_cast %44 : vector<1xf32> to vector<1x1xf32>
    %cst_14 = arith.constant 1.000000e-30 : f32
    %46 = vector.broadcast %cst_14 : f32 to vector<1x1xf32>
    %47 = arith.maximumf %45, %46 : vector<1x1xf32>
    %48 = vector.broadcast %47 : vector<1x1xf32> to vector<32x1xf32>
    %49 = arith.divf %43, %48 : vector<32x1xf32>
    %cst_15 = arith.constant dense<0.000000e+00> : vector<1x128xf32>
    %50 = tpu.matmul %49, %3, %cst_15 {dimension_numbers = #tpu.dot_dimension_numbers<[0], [0], [1], [1], [0, 1, 1, 1], [], []>} : vector<32x1xf32>, vector<32x128xf32>, vector<1x128xf32> -> vector<1x128xf32>
    %c1 = arith.constant 1 : index
    %c0_16 = arith.constant 0 : index
    %51 = vector.load %arg3[%c1, %c0_16] : memref<8x128xf32, #tpu.memory_space<vmem>>, vector<1x128xf32>
    %c3 = arith.constant 3 : index
    %c0_17 = arith.constant 0 : index
    %52 = vector.load %arg3[%c3, %c0_17] : memref<8x128xf32, #tpu.memory_space<vmem>>, vector<1x128xf32>
    %cst_18 = arith.constant dense<0.000000e+00> : vector<32x1xf32>
    %53 = tpu.matmul %4, %51, %cst_18 {dimension_numbers = #tpu.dot_dimension_numbers<[1], [1], [0], [0], [0, 0, 1, 0], [], []>} : vector<32x128xf32>, vector<1x128xf32>, vector<32x1xf32> -> vector<32x1xf32>
    %54 = arith.mulf %6, %52 : vector<1x128xf32>
    %55 = vector.shape_cast %54 : vector<1x128xf32> to vector<1x1x128xf32>
    %cst_19 = arith.constant dense<0.000000e+00> : vector<1xf32>
    %56 = vector.multi_reduction <add>, %55, %cst_19 [1, 2] : vector<1x1x128xf32> to vector<1xf32>
    %57 = vector.shape_cast %56 : vector<1xf32> to vector<1x1x1xf32>
    %58 = vector.extract %57[0, 0, 0] : f32 from vector<1x1x1xf32>
    %59 = vector.broadcast %58 : f32 to vector<1x1xf32>
    %60 = vector.broadcast %59 : vector<1x1xf32> to vector<32x1xf32>
    %61 = arith.addf %60, %53 : vector<32x1xf32>
    %cst_20 = arith.constant 0.000000e+00 : f32
    %62 = vector.broadcast %cst_20 : f32 to vector<32x1xf32>
    %63 = arith.cmpf ogt, %61, %62 : vector<32x1xf32>
    %cst_21 = arith.constant 2.000000e-01 : f32
    %64 = vector.broadcast %cst_21 : f32 to vector<32x1xf32>
    %65 = arith.mulf %64, %61 : vector<32x1xf32>
    %66 = arith.select %63, %61, %65 : vector<32x1xi1>, vector<32x1xf32>
    %cst_22 = arith.constant -1.000000e+30 : f32
    %67 = vector.broadcast %cst_22 : f32 to vector<32x1xf32>
    %68 = arith.select %17, %66, %67 : vector<32x1xi1>, vector<32x1xf32>
    %cst_23 = arith.constant dense<0xFF800000> : vector<1xf32>
    %69 = vector.multi_reduction <maximumf>, %68, %cst_23 [0] : vector<32x1xf32> to vector<1xf32>
    %70 = vector.shape_cast %69 : vector<1xf32> to vector<1x1xf32>
    %71 = vector.broadcast %70 : vector<1x1xf32> to vector<32x1xf32>
    %72 = arith.subf %68, %71 : vector<32x1xf32>
    %73 = math.exp %72 : vector<32x1xf32>
    %74 = arith.extui %17 : vector<32x1xi1> to vector<32x1xi32>
    %75 = arith.sitofp %74 : vector<32x1xi32> to vector<32x1xf32>
    %76 = arith.mulf %73, %75 : vector<32x1xf32>
    %cst_24 = arith.constant dense<0.000000e+00> : vector<1xf32>
    %77 = vector.multi_reduction <add>, %76, %cst_24 [0] : vector<32x1xf32> to vector<1xf32>
    %78 = vector.shape_cast %77 : vector<1xf32> to vector<1x1xf32>
    %cst_25 = arith.constant 1.000000e-30 : f32
    %79 = vector.broadcast %cst_25 : f32 to vector<1x1xf32>
    %80 = arith.maximumf %78, %79 : vector<1x1xf32>
    %81 = vector.broadcast %80 : vector<1x1xf32> to vector<32x1xf32>
    %82 = arith.divf %76, %81 : vector<32x1xf32>
    %cst_26 = arith.constant dense<0.000000e+00> : vector<1x128xf32>
    %83 = tpu.matmul %82, %4, %cst_26 {dimension_numbers = #tpu.dot_dimension_numbers<[0], [0], [1], [1], [0, 1, 1, 1], [], []>} : vector<32x1xf32>, vector<32x128xf32>, vector<1x128xf32> -> vector<1x128xf32>
    %84 = vector.extract_strided_slice %0 {offsets = [0, 0], sizes = [1, 128], strides = [1, 1]} : vector<32x128xf32> to vector<1x128xf32>
    %c4 = arith.constant 4 : index
    %c0_27 = arith.constant 0 : index
    %85 = vector.load %arg3[%c4, %c0_27] : memref<8x128xf32, #tpu.memory_space<vmem>>, vector<1x128xf32>
    %86 = arith.mulf %85, %50 : vector<1x128xf32>
    %87 = vector.shape_cast %86 : vector<1x128xf32> to vector<1x1x128xf32>
    %cst_28 = arith.constant dense<0.000000e+00> : vector<1xf32>
    %88 = vector.multi_reduction <add>, %87, %cst_28 [1, 2] : vector<1x1x128xf32> to vector<1xf32>
    %89 = vector.shape_cast %88 : vector<1xf32> to vector<1x1x1xf32>
    %90 = vector.extract %89[0, 0, 0] : f32 from vector<1x1x1xf32>
    %91 = vector.broadcast %90 : f32 to vector<1x1xf32>
    %c0_29 = arith.constant 0 : index
    %92 = memref.load %arg0[%c0_29] : memref<3xf32, #tpu.memory_space<smem>>
    %93 = vector.broadcast %92 : f32 to vector<1x1xf32>
    %94 = arith.addf %91, %93 : vector<1x1xf32>
    %95 = arith.mulf %85, %83 : vector<1x128xf32>
    %96 = vector.shape_cast %95 : vector<1x128xf32> to vector<1x1x128xf32>
    %cst_30 = arith.constant dense<0.000000e+00> : vector<1xf32>
    %97 = vector.multi_reduction <add>, %96, %cst_30 [1, 2] : vector<1x1x128xf32> to vector<1xf32>
    %98 = vector.shape_cast %97 : vector<1xf32> to vector<1x1x1xf32>
    %99 = vector.extract %98[0, 0, 0] : f32 from vector<1x1x1xf32>
    %100 = vector.broadcast %99 : f32 to vector<1x1xf32>
    %c1_31 = arith.constant 1 : index
    %101 = memref.load %arg0[%c1_31] : memref<3xf32, #tpu.memory_space<smem>>
    %102 = vector.broadcast %101 : f32 to vector<1x1xf32>
    %103 = arith.addf %100, %102 : vector<1x1xf32>
    %104 = arith.mulf %85, %84 : vector<1x128xf32>
    %105 = vector.shape_cast %104 : vector<1x128xf32> to vector<1x1x128xf32>
    %cst_32 = arith.constant dense<0.000000e+00> : vector<1xf32>
    %106 = vector.multi_reduction <add>, %105, %cst_32 [1, 2] : vector<1x1x128xf32> to vector<1xf32>
    %107 = vector.shape_cast %106 : vector<1xf32> to vector<1x1x1xf32>
    %108 = vector.extract %107[0, 0, 0] : f32 from vector<1x1x1xf32>
    %109 = vector.broadcast %108 : f32 to vector<1x1xf32>
    %c2_33 = arith.constant 2 : index
    %110 = memref.load %arg0[%c2_33] : memref<3xf32, #tpu.memory_space<smem>>
    %111 = vector.broadcast %110 : f32 to vector<1x1xf32>
    %112 = arith.addf %109, %111 : vector<1x1xf32>
    %113 = arith.maximumf %94, %103 : vector<1x1xf32>
    %114 = arith.maximumf %113, %112 : vector<1x1xf32>
    %115 = arith.subf %94, %114 : vector<1x1xf32>
    %116 = math.exp %115 : vector<1x1xf32>
    %117 = arith.subf %103, %114 : vector<1x1xf32>
    %118 = math.exp %117 : vector<1x1xf32>
    %119 = arith.subf %112, %114 : vector<1x1xf32>
    %120 = math.exp %119 : vector<1x1xf32>
    %121 = arith.addf %116, %118 : vector<1x1xf32>
    %122 = arith.addf %121, %120 : vector<1x1xf32>
    %cst_34 = arith.constant 1.000000e+00 : f32
    %123 = vector.broadcast %cst_34 : f32 to vector<1x1xf32>
    %124 = arith.divf %123, %122 : vector<1x1xf32>
    %125 = arith.mulf %120, %124 : vector<1x1xf32>
    %126 = vector.broadcast %125 : vector<1x1xf32> to vector<1x128xf32>
    %127 = arith.mulf %126, %84 : vector<1x128xf32>
    %128 = arith.mulf %116, %124 : vector<1x1xf32>
    %129 = vector.broadcast %128 : vector<1x1xf32> to vector<1x128xf32>
    %130 = arith.mulf %129, %50 : vector<1x128xf32>
    %131 = arith.addf %127, %130 : vector<1x128xf32>
    %132 = arith.mulf %118, %124 : vector<1x1xf32>
    %133 = vector.broadcast %132 : vector<1x1xf32> to vector<1x128xf32>
    %134 = arith.mulf %133, %83 : vector<1x128xf32>
    %135 = arith.addf %131, %134 : vector<1x128xf32>
    %c0_35 = arith.constant 0 : index
    %c0_36 = arith.constant 0 : index
    %136 = vector.load %arg4[%c0_35, %c0_36] : memref<1x128xf32, #tpu.memory_space<vmem>>, vector<1x128xf32>
    tpu.vector_store %arg4[%c0_35, %c0_36], %135 {strides = array<i32>} : memref<1x128xf32, #tpu.memory_space<vmem>>, vector<1x128xf32>,
    return
  }
}

</mosaic_0001>

<llo_original>
// kernel: _forward_impl.1
$region0: #{_forward_impl.1}
  #allocation0 [shape = 'u32[]', space=smem, size = 0x4, offset = 0x4, fixed_abs, tag = 'smem constant byte address 0x4 - core index']
  #allocation1 [shape = 'u32[144,128]{1,0:T(1,128)}', space=vmem, size = 0x12000, scoped, tag = 'internal scratch']
  %s0 = inlined_call_operand.vmem [shape: f32[3], index: 0, kind: input, shape index: {}]
  %s1 = inlined_call_operand.vmem [shape: f32[32,128], index: 1, kind: input, shape index: {}]
  %s2 = inlined_call_operand.hbm [shape: f32[128,256], index: 2, kind: input, shape index: {}]
  %s3 = inlined_call_operand.vmem [shape: f32[8,128], index: 3, kind: input, shape index: {}]
  %s4 = inlined_call_operand.vmem [shape: f32[1,128], index: 4, kind: output, shape index: {}]
  %s5 = sld [smem:[#allocation0]]
  $region34: #{_forward_impl.1} parent=0
    _
  %s7 = ssub.s32 1, %s5
  %s8 = scalar_select 0, %s7, %s5
  $region1: #{_forward_impl.1} parent=0
    #allocation2 [shape = 'u8[512]{0}', space=smem, size = 0x200, scoped, tag = 'input window, operand 0, single buffered']
    #allocation3 [shape = 's32[1]{0}', space=sflag, size = 0x4, scoped, tag = 'scoped memory for _forward_impl.1']
    #allocation4 [shape = 's32[1]{0}', space=sflag, size = 0x4, scoped, tag = 'scoped memory for _forward_impl.1']
    #allocation5 [shape = 'u8[131072]{0}', space=vmem, size = 0x20000, scoped, tag = 'input window, operand 2, single buffered']
    %9 = vsyncpa [#allocation4], 0
    %10 = vsyncpa [#allocation3], 0
    // Predicated region
    $region2: #{_forward_impl.1} parent=1 // pred_check
      _
    $region3: #{_forward_impl.1} parent=1 // pred_check_branch
      %12 = sbr.rel (0) target = $region5
    $region4: #{_forward_impl.1} parent=1 // pred_region
      %s14 = ssub.s32 16, 16
      %15 = vsyncadd [#allocation4], %s14
      %s17 = sshll.u32 %s0, 4
      %s18 = int_to_ptr.vmem [resolvable:$true] %s17
      %20 = dma.vmem_to_smem %s18, 16, [#allocation2], [#allocation4]
    $region5: #{_forward_impl.1} parent=1 // pred_fallthru
      _
    // Predicated region
    $region6: #{_forward_impl.1} parent=1 // pred_check
      _
    $region7: #{_forward_impl.1} parent=1 // pred_check_branch
      %22 = sbr.rel (0) target = $region9
    $region8: #{_forward_impl.1} parent=1 // pred_region
      _
    $region9: #{_forward_impl.1} parent=1 // pred_fallthru
      _
    // Predicated region
    $region10: #{_forward_impl.1} parent=1 // pred_check
      _
    $region11: #{_forward_impl.1} parent=1 // pred_check_branch
      %24 = sbr.rel (0) target = $region13
    $region12: #{_forward_impl.1} parent=1 // pred_region
      %s26 = ssub.s32 4096, 4096
      %27 = vsyncadd [#allocation3], %s26
      %s28 = sshll.u32 [#allocation5], 4
      %s29 = int_to_ptr.vmem [resolvable:$true] %s28
      %34 = dma.hbm_to_vmem [thread:$0]  %s2, 4096, %s29, [#allocation3], 256, 256, 16
    $region13: #{_forward_impl.1} parent=1 // pred_fallthru
      _
    // Predicated region
    $region14: #{_forward_impl.1} parent=1 // pred_check
      _
    $region15: #{_forward_impl.1} parent=1 // pred_check_branch
      %36 = sbr.rel (0) target = $region17
    $region16: #{_forward_impl.1} parent=1 // pred_region
      _
    $region17: #{_forward_impl.1} parent=1 // pred_fallthru
      _
    // Predicated region
    $region18: #{_forward_impl.1} parent=1 // pred_check
      _
    $region19: #{_forward_impl.1} parent=1 // pred_check_branch
      %38 = sbr.rel (0) target = $region21
    $region20: #{_forward_impl.1} parent=1 // pred_region
      %39 = dma.done [#allocation4], 16
    $region21: #{_forward_impl.1} parent=1 // pred_fallthru
      _
    // Predicated region
    $region22: #{_forward_impl.1} parent=1 // pred_check
      _
    $region23: #{_forward_impl.1} parent=1 // pred_check_branch
      %41 = sbr.rel (0) target = $region25
    $region24: #{_forward_impl.1} parent=1 // pred_region
      %42 = dma.done [#allocation3], 4096
    $region25: #{_forward_impl.1} parent=1 // pred_fallthru
      _
    %43 = sfence
    %v44 = vld [vmem:[%s1] sm:$0xff]
    %v45 = vld [vmem:[%s1 + $0x8] sm:$0xff]
    %v46 = vld [vmem:[%s1 + $0x10] sm:$0xff]
    %v47 = vld [vmem:[%s1 + $0x18] sm:$0xff]
    %v48 = vld [vmem:[#allocation5] sm:$0xff]
    %v49 = vld [vmem:[#allocation5 + $0x8] sm:$0xff]
    %v50 = vld [vmem:[#allocation5 + $0x10] sm:$0xff]
    %v51 = vld [vmem:[#allocation5 + $0x18] sm:$0xff]
    %v52 = vld [vmem:[#allocation5 + $0x20] sm:$0xff]
    %v53 = vld [vmem:[#allocation5 + $0x28] sm:$0xff]
    %v54 = vld [vmem:[#allocation5 + $0x30] sm:$0xff]
    %v55 = vld [vmem:[#allocation5 + $0x38] sm:$0xff]
    %v56 = vld [vmem:[#allocation5 + $0x40] sm:$0xff]
    %v57 = vld [vmem:[#allocation5 + $0x48] sm:$0xff]
    %v58 = vld [vmem:[#allocation5 + $0x50] sm:$0xff]
    %v59 = vld [vmem:[#allocation5 + $0x58] sm:$0xff]
    %v60 = vld [vmem:[#allocation5 + $0x60] sm:$0xff]
    %v61 = vld [vmem:[#allocation5 + $0x68] sm:$0xff]
    %v62 = vld [vmem:[#allocation5 + $0x70] sm:$0xff]
    %v63 = vld [vmem:[#allocation5 + $0x78] sm:$0xff]
    %v64 = vld [vmem:[#allocation5 + $0x80] sm:$0xff]
    %v65 = vld [vmem:[#allocation5 + $0x88] sm:$0xff]
    %v66 = vld [vmem:[#allocation5 + $0x90] sm:$0xff]
    %v67 = vld [vmem:[#allocation5 + $0x98] sm:$0xff]
    %v68 = vld [vmem:[#allocation5 + $0xa0] sm:$0xff]
    %v69 = vld [vmem:[#allocation5 + $0xa8] sm:$0xff]
    %v70 = vld [vmem:[#allocation5 + $0xb0] sm:$0xff]
    %v71 = vld [vmem:[#allocation5 + $0xb8] sm:$0xff]
    %v72 = vld [vmem:[#allocation5 + $0xc0] sm:$0xff]
    %v73 = vld [vmem:[#allocation5 + $0xc8] sm:$0xff]
    %v74 = vld [vmem:[#allocation5 + $0xd0] sm:$0xff]
    %v75 = vld [vmem:[#allocation5 + $0xd8] sm:$0xff]
    %v76 = vld [vmem:[#allocation5 + $0xe0] sm:$0xff]
    %v77 = vld [vmem:[#allocation5 + $0xe8] sm:$0xff]
    %v78 = vld [vmem:[#allocation5 + $0xf0] sm:$0xff]
    %v79 = vld [vmem:[#allocation5 + $0xf8] sm:$0xff]
    %80 = vmatprep.subr.mxu0 %v79
    %81 = vmatpush1.msra.mxu0 %v78
    %82 = vmatprep.subr.mxu0 %v77
    %83 = vmatpush1.msra.mxu0 %v76
    %84 = vmatprep.subr.mxu0 %v75
    %85 = vmatpush1.msra.mxu0 %v74
    %86 = vmatprep.subr.mxu0 %v73
    %87 = vmatpush1.msra.mxu0 %v72
    %88 = vmatprep.subr.mxu0 %v71
    %89 = vmatpush1.msra.mxu0 %v70
    %90 = vmatprep.subr.mxu0 %v69
    %91 = vmatpush1.msra.mxu0 %v68
    %92 = vmatprep.subr.mxu0 %v67
    %93 = vmatpush1.msra.mxu0 %v66
    %94 = vmatprep.subr.mxu0 %v65
    %95 = vmatpush1.msra.mxu0 %v64
    %96 = vmatprep.subr.mxu0 %v63
    %97 = vmatpush1.msra.mxu0 %v62
    %98 = vmatprep.subr.mxu0 %v61
    %99 = vmatpush1.msra.mxu0 %v60
    %100 = vmatprep.subr.mxu0 %v59
    %101 = vmatpush1.msra.mxu0 %v58
    %102 = vmatprep.subr.mxu0 %v57
    %103 = vmatpush1.msra.mxu0 %v56
    %104 = vmatprep.subr.mxu0 %v55
    %105 = vmatpush1.msra.mxu0 %v54
    %106 = vmatprep.subr.mxu0 %v53
    %107 = vmatpush1.msra.mxu0 %v52
    %108 = vmatprep.subr.mxu0 %v51
    %109 = vmatpush1.msra.mxu0 %v50
    %110 = vmatprep.subr.mxu0 %v49
    %111 = vmatpush1.msra.mxu0 %v48
    %112 = vmatprep.subr.mxu0 0.0
    %113 = vmatpush2.msra.mxu0 0.0
    %114 = vmatprep.subr.mxu0 0.0
    %115 = vmatpush2.msra.mxu0 0.0
    %116 = vmatprep.subr.mxu0 0.0
    %117 = vmatpush2.msra.mxu0 0.0
    %118 = vmatprep.subr.mxu0 0.0
    %119 = vmatpush2.msra.mxu0 0.0
    %120 = vmatprep.subr.mxu0 0.0
    %121 = vmatpush2.msra.mxu0 0.0
    %122 = vmatprep.subr.mxu0 0.0
    %123 = vmatpush2.msra.mxu0 0.0
    %124 = vmatprep.subr.mxu0 0.0
    %125 = vmatpush2.msra.mxu0 0.0
    %126 = vmatprep.subr.mxu0 0.0
    %127 = vmatpush2.msra.mxu0 0.0
    %128 = vmatprep.subr.mxu0 0.0
    %129 = vmatpush2.msra.mxu0 0.0
    %130 = vmatprep.subr.mxu0 0.0
    %131 = vmatpush2.msra.mxu0 0.0
    %132 = vmatprep.subr.mxu0 0.0
    %133 = vmatpush2.msra.mxu0 0.0
    %134 = vmatprep.subr.mxu0 0.0
    %135 = vmatpush2.msra.mxu0 0.0
    %136 = vmatprep.subr.mxu0 0.0
    %137 = vmatpush2.msra.mxu0 0.0
    %138 = vmatprep.subr.mxu0 0.0
    %139 = vmatpush2.msra.mxu0 0.0
    %140 = vmatprep.subr.mxu0 0.0
    %141 = vmatpush2.msra.mxu0 0.0
    %142 = vmatprep.subr.mxu0 0.0
    %143 = vmatpush2.msra.mxu0 0.0
    %144 = vmatprep.mubr.f32.mxu0 0.0
    %145 = vmatmul.mubr.f32.gmra.mxu0 %v44
    %v146 = vpop.f32.mrf.mxu0
    %v147 = vadd.f32 0.0, %v146
    %v148 = vpop.f32.mrf.mxu0
    %v149 = vadd.f32 0.0, %v148
    %150 = vmatprep.mubr.f32.mxu0 0.0
    %151 = vmatmul.mubr.f32.gmra.mxu0 %v45
    %v152 = vpop.f32.mrf.mxu0
    %v153 = vadd.f32 0.0, %v152
    %v154 = vpop.f32.mrf.mxu0
    %v155 = vadd.f32 0.0, %v154
    %156 = vmatprep.mubr.f32.mxu0 0.0
    %157 = vmatmul.mubr.f32.gmra.mxu0 %v46
    %v158 = vpop.f32.mrf.mxu0
    %v159 = vadd.f32 0.0, %v158
    %v160 = vpop.f32.mrf.mxu0
    %v161 = vadd.f32 0.0, %v160
    %162 = vmatprep.mubr.f32.mxu0 0.0
    %163 = vmatmul.mubr.f32.gmra.mxu0 %v47
    %v164 = vpop.f32.mrf.mxu0
    %v165 = vadd.f32 0.0, %v164
    %v166 = vpop.f32.mrf.mxu0
    %v167 = vadd.f32 0.0, %v166
    %168 = vdwg.mxu0
    %v169 = vlaneseq
    %v170 = vshrl.u32 %v169, 7
    %v171 = vadd.s32 %v170, 8
    %v172 = vadd.s32 %v170, 16
    %v173 = vadd.s32 %v170, 24
    %vm174 = vcmp.ge.s32.totalorder %v170, 8
    %vm175 = vcmp.ge.s32.totalorder %v171, 8
    %vm176 = vcmp.ge.s32.totalorder %v172, 8
    %vm177 = vcmp.ge.s32.totalorder %v173, 8
    %vm178 = vcmp.lt.s32.totalorder %v170, 16
    %vm179 = vcmp.lt.s32.totalorder %v171, 16
    %vm180 = vcmp.lt.s32.totalorder %v172, 16
    %vm181 = vcmp.lt.s32.totalorder %v173, 16
    %vm182 = vmand %vm174, %vm178
    %vm183 = vmand %vm175, %vm179
    %vm184 = vmand %vm176, %vm180
    %vm185 = vmand %vm177, %vm181
    %vm186 = vcmp.ge.s32.totalorder %v170, 16
    %vm187 = vcmp.ge.s32.totalorder %v171, 16
    %vm188 = vcmp.ge.s32.totalorder %v172, 16
    %vm189 = vcmp.ge.s32.totalorder %v173, 16
    %vm190 = vcmp.lt.s32.totalorder %v170, 28
    %vm191 = vcmp.lt.s32.totalorder %v171, 28
    %vm192 = vcmp.lt.s32.totalorder %v172, 28
    %vm193 = vcmp.lt.s32.totalorder %v173, 28
    %vm194 = vmand %vm186, %vm190
    %vm195 = vmand %vm187, %vm191
    %vm196 = vmand %vm188, %vm192
    %vm197 = vmand %vm189, %vm193
    %v198 = vld [vmem:[%s3] sm:$0x1]
    %v199 = vld [vmem:[%s3 + $0x2] sm:$0x1]
    %v200 = vlaneseq
    %v201 = vshrl.u32 %v200, 7
    %v202 = vsub.s32 0, %v201
    %v203 = vrot.slane %v198, %v202
    %v204 = vmul.f32 %v147, %v203
    %v205 = vmul.f32 %v153, %v203
    %v206 = vmul.f32 %v159, %v203
    %v207 = vmul.f32 %v165, %v203
    %208 = vadd.xlane.f32.xlu0 %v204
    %v209 = vpop.xlane.xlu0 %208
    %210 = vadd.xlane.f32.xlu0 %v205
    %v211 = vpop.xlane.xlu0 %210
    %212 = vadd.xlane.f32.xlu0 %v206
    %v213 = vpop.xlane.xlu0 %212
    %214 = vadd.xlane.f32.xlu0 %v207
    %v215 = vpop.xlane.xlu0 %214
    %v216 = vmul.f32 %v147, %v199
    %vm217 = vcmask 1040384
    %v218 = vsel %vm217, %v216, 0.0
    %219 = vadd.xlane.f32.xlu0 %v218
    %v220 = vpop.xlane.xlu0 %219
    %v221 = vrot.slane %v220, 4
    %v222 = vadd.f32 %v220, %v221
    %v223 = vrot.slane %v222, 2
    %v224 = vadd.f32 %v222, %v223
    %v225 = vrot.slane %v224, 1
    %v226 = vadd.f32 %v224, %v225
    %s227 = vtos %v226
    %v228 = vstv %s227
    %v229 = vadd.f32 %v228, %v209
    %v230 = vadd.f32 %v228, %v211
    %v231 = vadd.f32 %v228, %v213
    %v232 = vadd.f32 %v228, %v215
    %vm233 = vcmp.gt.f32.partialorder %v229, 0.0
    %vm234 = vcmp.gt.f32.partialorder %v230, 0.0
    %vm235 = vcmp.gt.f32.partialorder %v231, 0.0
    %vm236 = vcmp.gt.f32.partialorder %v232, 0.0
    %v237 = vmul.f32 %v229, 0.2
    %v238 = vmul.f32 %v230, 0.2
    %v239 = vmul.f32 %v231, 0.2
    %v240 = vmul.f32 %v232, 0.2
    %v241 = vsel %vm233, %v229, %v237
    %v242 = vsel %vm234, %v230, %v238
    %v243 = vsel %vm235, %v231, %v239
    %v244 = vsel %vm236, %v232, %v240
    %v245 = vsel %vm182, %v241, -1e+30
    %v246 = vsel %vm183, %v242, -1e+30
    %v247 = vsel %vm184, %v243, -1e+30
    %v248 = vsel %vm185, %v244, -1e+30
    %v249 = vmax.f32 %v245, %v246
    %v250 = vmax.f32 %v247, %v248
    %v251 = vmax.f32 %v249, %v250
    %v252 = vrot.slane %v251, 4
    %v253 = vmax.f32 %v251, %v252
    %v254 = vrot.slane %v253, 2
    %v255 = vmax.f32 %v253, %v254
    %v256 = vrot.slane %v255, 1
    %v257 = vmax.f32 %v255, %v256
    %v258 = vsub.f32 %v245, %v257
    %v259 = vsub.f32 %v246, %v257
    %v260 = vsub.f32 %v247, %v257
    %v261 = vsub.f32 %v248, %v257
    %v262 = vmul.f32 %v258, 1.442695
    %v263 = vpow.pop %v262
    %v264 = vmul.f32 %v259, 1.442695
    %v265 = vpow.pop %v264
    %v266 = vmul.f32 %v260, 1.442695
    %v267 = vpow.pop %v266
    %v268 = vmul.f32 %v261, 1.442695
    %v269 = vpow.pop %v268
    %v270 = vsel %vm182, 1, 0
    %v271 = vsel %vm183, 1, 0
    %v272 = vsel %vm184, 1, 0
    %v273 = vsel %vm185, 1, 0
    %v274 = vcvt.s32.f32 %v270
    %v275 = vcvt.s32.f32 %v271
    %v276 = vcvt.s32.f32 %v272
    %v277 = vcvt.s32.f32 %v273
    %v278 = vmul.f32 %v263, %v274
    %v279 = vmul.f32 %v265, %v275
    %v280 = vmul.f32 %v267, %v276
    %v281 = vmul.f32 %v269, %v277
    %v282 = vadd.f32 %v278, %v279
    %v283 = vadd.f32 %v282, %v280
    %v284 = vadd.f32 %v283, %v281
    %v285 = vrot.slane %v284, 4
    %v286 = vadd.f32 %v284, %v285
    %v287 = vrot.slane %v286, 2
    %v288 = vadd.f32 %v286, %v287
    %v289 = vrot.slane %v288, 1
    %v290 = vadd.f32 %v288, %v289
    %v291 = vmax.f32 %v290, 1e-30
    %v292 = vrcp.pop %v291
    %v293 = vmul.f32 %v278, %v292
    %v294 = vmul.f32 %v279, %v292
    %v295 = vmul.f32 %v280, %v292
    %v296 = vmul.f32 %v281, %v292
    %297 = vxpose.xlu0.b32.start [1/16] %v293, 128
    %298 = vxpose.xlu0.b32.cont [2/16] %v294, 128
    %299 = vxpose.xlu0.b32.cont [3/16] %v295, 128
    %300 = vxpose.xlu0.b32.cont [4/16] %v296, 128
    %301 = vxpose.xlu0.b32.cont [5/16] 0.0, 128
    %302 = vxpose.xlu0.b32.cont [6/16] 0.0, 128
    %303 = vxpose.xlu0.b32.cont [7/16] 0.0, 128
    %304 = vxpose.xlu0.b32.cont [8/16] 0.0, 128
    %305 = vxpose.xlu0.b32.cont [9/16] 0.0, 128
    %306 = vxpose.xlu0.b32.cont [10/16] 0.0, 128
    %307 = vxpose.xlu0.b32.cont [11/16] 0.0, 128
    %308 = vxpose.xlu0.b32.cont [12/16] 0.0, 128
    %309 = vxpose.xlu0.b32.cont [13/16] 0.0, 128
    %310 = vxpose.xlu0.b32.cont [14/16] 0.0, 128
    %311 = vxpose.xlu0.b32.cont [15/16] 0.0, 128
    %312 = vxpose.xlu0.b32.end [16/16] 0.0, 128
    %v313 = vpop.trf.xlu0
    %v314 = vpop.trf.xlu0
    %v315 = vpop.trf.xlu0
    %v316 = vpop.trf.xlu0
    %v317 = vpop.trf.xlu0
    %v318 = vpop.trf.xlu0
    %v319 = vpop.trf.xlu0
    %v320 = vpop.trf.xlu0
    %v321 = vpop.trf.xlu0
    %v322 = vpop.trf.xlu0
    %v323 = vpop.trf.xlu0
    %v324 = vpop.trf.xlu0
    %v325 = vpop.trf.xlu0
    %v326 = vpop.trf.xlu0
    %v327 = vpop.trf.xlu0
    %v328 = vpop.trf.xlu0
    %vm329 = vcmask 261120
    %v331 = vsel %vm329, %v313, 0
    %333 = vmatprep.subr.mxu0 0.0
    %334 = vmatpush1.msra.mxu0 0.0
    %335 = vmatprep.subr.mxu0 0.0
    %336 = vmatpush1.msra.mxu0 0.0
    %337 = vmatprep.subr.mxu0 0.0
    %338 = vmatpush1.msra.mxu0 0.0
    %339 = vmatprep.subr.mxu0 0.0
    %340 = vmatpush1.msra.mxu0 0.0
    %341 = vmatprep.subr.mxu0 0.0
    %342 = vmatpush1.msra.mxu0 0.0
    %343 = vmatprep.subr.mxu0 0.0
    %344 = vmatpush1.msra.mxu0 0.0
    %345 = vmatprep.subr.mxu0 0.0
    %346 = vmatpush1.msra.mxu0 0.0
    %347 = vmatprep.subr.mxu0 0.0
    %348 = vmatpush1.msra.mxu0 0.0
    %349 = vmatprep.subr.mxu0 0.0
    %350 = vmatpush1.msra.mxu0 0.0
    %351 = vmatprep.subr.mxu0 0.0
    %352 = vmatpush1.msra.mxu0 0.0
    %353 = vmatprep.subr.mxu0 0.0
    %354 = vmatpush1.msra.mxu0 0.0
    %355 = vmatprep.subr.mxu0 0.0
    %356 = vmatpush1.msra.mxu0 0.0
    %357 = vmatprep.subr.mxu0 0.0
    %358 = vmatpush1.msra.mxu0 %v165
    %359 = vmatprep.subr.mxu0 0.0
    %360 = vmatpush1.msra.mxu0 %v159
    %361 = vmatprep.subr.mxu0 0.0
    %362 = vmatpush1.msra.mxu0 %v153
    %363 = vmatprep.subr.mxu0 0.0
    %364 = vmatpush1.msra.mxu0 %v147
    %365 = vmatprep.subr.mxu0 0.0
    %366 = vmatpush2.msra.mxu0 0.0
    %367 = vmatprep.subr.mxu0 0.0
    %368 = vmatpush2.msra.mxu0 0.0
    %369 = vmatprep.subr.mxu0 0.0
    %370 = vmatpush2.msra.mxu0 0.0
    %371 = vmatprep.subr.mxu0 0.0
    %372 = vmatpush2.msra.mxu0 0.0
    %373 = vmatprep.subr.mxu0 0.0
    %374 = vmatpush2.msra.mxu0 0.0
    %375 = vmatprep.subr.mxu0 0.0
    %376 = vmatpush2.msra.mxu0 0.0
    %377 = vmatprep.subr.mxu0 0.0
    %378 = vmatpush2.msra.mxu0 0.0
    %379 = vmatprep.subr.mxu0 0.0
    %380 = vmatpush2.msra.mxu0 0.0
    %381 = vmatprep.subr.mxu0 0.0
    %382 = vmatpush2.msra.mxu0 0.0
    %383 = vmatprep.subr.mxu0 0.0
    %384 = vmatpush2.msra.mxu0 0.0
    %385 = vmatprep.subr.mxu0 0.0
    %386 = vmatpush2.msra.mxu0 0.0
    %387 = vmatprep.subr.mxu0 0.0
    %388 = vmatpush2.msra.mxu0 0.0
    %389 = vmatprep.subr.mxu0 0.0
    %390 = vmatpush2.msra.mxu0 0.0
    %391 = vmatprep.subr.mxu0 0.0
    %392 = vmatpush2.msra.mxu0 0.0
    %393 = vmatprep.subr.mxu0 0.0
    %394 = vmatpush2.msra.mxu0 0.0
    %395 = vmatprep.subr.mxu0 0.0
    %396 = vmatpush2.msra.mxu0 0.0
    %397 = vmatprep.mubr.f32.mxu0 0.0
    %398 = vmatmul.mubr.f32.gmra.mxu0 %v331
    %v399 = vpop.f32.mrf.mxu0
    %v400 = vadd.f32 0.0, %v399
    %v401 = vpop.f32.mrf.mxu0
    %402 = vdwg.mxu0
    %v403 = vld [vmem:[%s3 + $0x1] sm:$0x1]
    %v404 = vld [vmem:[%s3 + $0x3] sm:$0x1]
    %v405 = vlaneseq
    %v406 = vshrl.u32 %v405, 7
    %v407 = vsub.s32 0, %v406
    %v408 = vrot.slane %v403, %v407
    %v409 = vmul.f32 %v149, %v408
    %v410 = vmul.f32 %v155, %v408
    %v411 = vmul.f32 %v161, %v408
    %v412 = vmul.f32 %v167, %v408
    %413 = vadd.xlane.f32.xlu0 %v409
    %v414 = vpop.xlane.xlu0 %413
    %415 = vadd.xlane.f32.xlu0 %v410
    %v416 = vpop.xlane.xlu0 %415
    %417 = vadd.xlane.f32.xlu0 %v411
    %v418 = vpop.xlane.xlu0 %417
    %419 = vadd.xlane.f32.xlu0 %v412
    %v420 = vpop.xlane.xlu0 %419
    %v421 = vmul.f32 %v149, %v404
    %v422 = vsel %vm217, %v421, 0.0
    %423 = vadd.xlane.f32.xlu0 %v422
    %v424 = vpop.xlane.xlu0 %423
    %v425 = vrot.slane %v424, 4
    %v426 = vadd.f32 %v424, %v425
    %v427 = vrot.slane %v426, 2
    %v428 = vadd.f32 %v426, %v427
    %v429 = vrot.slane %v428, 1
    %v430 = vadd.f32 %v428, %v429
    %s431 = vtos %v430
    %v432 = vstv %s431
    %v433 = vadd.f32 %v432, %v414
    %v434 = vadd.f32 %v432, %v416
    %v435 = vadd.f32 %v432, %v418
    %v436 = vadd.f32 %v432, %v420
    %vm437 = vcmp.gt.f32.partialorder %v433, 0.0
    %vm438 = vcmp.gt.f32.partialorder %v434, 0.0
    %vm439 = vcmp.gt.f32.partialorder %v435, 0.0
    %vm440 = vcmp.gt.f32.partialorder %v436, 0.0
    %v441 = vmul.f32 %v433, 0.2
    %v442 = vmul.f32 %v434, 0.2
    %v443 = vmul.f32 %v435, 0.2
    %v444 = vmul.f32 %v436, 0.2
    %v445 = vsel %vm437, %v433, %v441
    %v446 = vsel %vm438, %v434, %v442
    %v447 = vsel %vm439, %v435, %v443
    %v448 = vsel %vm440, %v436, %v444
    %v449 = vsel %vm194, %v445, -1e+30
    %v450 = vsel %vm195, %v446, -1e+30
    %v451 = vsel %vm196, %v447, -1e+30
    %v452 = vsel %vm197, %v448, -1e+30
    %v453 = vmax.f32 %v449, %v450
    %v454 = vmax.f32 %v451, %v452
    %v455 = vmax.f32 %v453, %v454
    %v456 = vrot.slane %v455, 4
    %v457 = vmax.f32 %v455, %v456
    %v458 = vrot.slane %v457, 2
    %v459 = vmax.f32 %v457, %v458
    %v460 = vrot.slane %v459, 1
    %v461 = vmax.f32 %v459, %v460
    %v462 = vsub.f32 %v449, %v461
    %v463 = vsub.f32 %v450, %v461
    %v464 = vsub.f32 %v451, %v461
    %v465 = vsub.f32 %v452, %v461
    %v466 = vmul.f32 %v462, 1.442695
    %v467 = vpow.pop %v466
    %v468 = vmul.f32 %v463, 1.442695
    %v469 = vpow.pop %v468
    %v470 = vmul.f32 %v464, 1.442695
    %v471 = vpow.pop %v470
    %v472 = vmul.f32 %v465, 1.442695
    %v473 = vpow.pop %v472
    %v474 = vsel %vm194, 1, 0
    %v475 = vsel %vm195, 1, 0
    %v476 = vsel %vm196, 1, 0
    %v477 = vsel %vm197, 1, 0
    %v478 = vcvt.s32.f32 %v474
    %v479 = vcvt.s32.f32 %v475
    %v480 = vcvt.s32.f32 %v476
    %v481 = vcvt.s32.f32 %v477
    %v482 = vmul.f32 %v467, %v478
    %v483 = vmul.f32 %v469, %v479
    %v484 = vmul.f32 %v471, %v480
    %v485 = vmul.f32 %v473, %v481
    %v486 = vadd.f32 %v482, %v483
    %v487 = vadd.f32 %v486, %v484
    %v488 = vadd.f32 %v487, %v485
    %v489 = vrot.slane %v488, 4
    %v490 = vadd.f32 %v488, %v489
    %v491 = vrot.slane %v490, 2
    %v492 = vadd.f32 %v490, %v491
    %v493 = vrot.slane %v492, 1
    %v494 = vadd.f32 %v492, %v493
    %v495 = vmax.f32 %v494, 1e-30
    %v496 = vrcp.pop %v495
    %v497 = vmul.f32 %v482, %v496
    %v498 = vmul.f32 %v483, %v496
    %v499 = vmul.f32 %v484, %v496
    %v500 = vmul.f32 %v485, %v496
    %501 = vxpose.xlu0.b32.start [1/16] %v497, 128
    %502 = vxpose.xlu0.b32.cont [2/16] %v498, 128
    %503 = vxpose.xlu0.b32.cont [3/16] %v499, 128
    %504 = vxpose.xlu0.b32.cont [4/16] %v500, 128
    %505 = vxpose.xlu0.b32.cont [5/16] 0.0, 128
    %506 = vxpose.xlu0.b32.cont [6/16] 0.0, 128
    %507 = vxpose.xlu0.b32.cont [7/16] 0.0, 128
    %508 = vxpose.xlu0.b32.cont [8/16] 0.0, 128
    %509 = vxpose.xlu0.b32.cont [9/16] 0.0, 128
    %510 = vxpose.xlu0.b32.cont [10/16] 0.0, 128
    %511 = vxpose.xlu0.b32.cont [11/16] 0.0, 128
    %512 = vxpose.xlu0.b32.cont [12/16] 0.0, 128
    %513 = vxpose.xlu0.b32.cont [13/16] 0.0, 128
    %514 = vxpose.xlu0.b32.cont [14/16] 0.0, 128
    %515 = vxpose.xlu0.b32.cont [15/16] 0.0, 128
    %516 = vxpose.xlu0.b32.end [16/16] 0.0, 128
    %v517 = vpop.trf.xlu0
    %v518 = vpop.trf.xlu0
    %v519 = vpop.trf.xlu0
    %v520 = vpop.trf.xlu0
    %v521 = vpop.trf.xlu0
    %v522 = vpop.trf.xlu0
    %v523 = vpop.trf.xlu0
    %v524 = vpop.trf.xlu0
    %v525 = vpop.trf.xlu0
    %v526 = vpop.trf.xlu0
    %v527 = vpop.trf.xlu0
    %v528 = vpop.trf.xlu0
    %v529 = vpop.trf.xlu0
    %v530 = vpop.trf.xlu0
    %v531 = vpop.trf.xlu0
    %v532 = vpop.trf.xlu0
    %v534 = vsel %vm329, %v517, 0
    %536 = vmatprep.subr.mxu0 0.0
    %537 = vmatpush1.msra.mxu0 0.0
    %538 = vmatprep.subr.mxu0 0.0
    %539 = vmatpush1.msra.mxu0 0.0
    %540 = vmatprep.subr.mxu0 0.0
    %541 = vmatpush1.msra.mxu0 0.0
    %542 = vmatprep.subr.mxu0 0.0
    %543 = vmatpush1.msra.mxu0 0.0
    %544 = vmatprep.subr.mxu0 0.0
    %545 = vmatpush1.msra.mxu0 0.0
    %546 = vmatprep.subr.mxu0 0.0
    %547 = vmatpush1.msra.mxu0 0.0
    %548 = vmatprep.subr.mxu0 0.0
    %549 = vmatpush1.msra.mxu0 0.0
    %550 = vmatprep.subr.mxu0 0.0
    %551 = vmatpush1.msra.mxu0 0.0
    %552 = vmatprep.subr.mxu0 0.0
    %553 = vmatpush1.msra.mxu0 0.0
    %554 = vmatprep.subr.mxu0 0.0
    %555 = vmatpush1.msra.mxu0 0.0
    %556 = vmatprep.subr.mxu0 0.0
    %557 = vmatpush1.msra.mxu0 0.0
    %558 = vmatprep.subr.mxu0 0.0
    %559 = vmatpush1.msra.mxu0 0.0
    %560 = vmatprep.subr.mxu0 0.0
    %561 = vmatpush1.msra.mxu0 %v167
    %562 = vmatprep.subr.mxu0 0.0
    %563 = vmatpush1.msra.mxu0 %v161
    %564 = vmatprep.subr.mxu0 0.0
    %565 = vmatpush1.msra.mxu0 %v155
    %566 = vmatprep.subr.mxu0 0.0
    %567 = vmatpush1.msra.mxu0 %v149
    %568 = vmatprep.subr.mxu0 0.0
    %569 = vmatpush2.msra.mxu0 0.0
    %570 = vmatprep.subr.mxu0 0.0
    %571 = vmatpush2.msra.mxu0 0.0
    %572 = vmatprep.subr.mxu0 0.0
    %573 = vmatpush2.msra.mxu0 0.0
    %574 = vmatprep.subr.mxu0 0.0
    %575 = vmatpush2.msra.mxu0 0.0
    %576 = vmatprep.subr.mxu0 0.0
    %577 = vmatpush2.msra.mxu0 0.0
    %578 = vmatprep.subr.mxu0 0.0
    %579 = vmatpush2.msra.mxu0 0.0
    %580 = vmatprep.subr.mxu0 0.0
    %581 = vmatpush2.msra.mxu0 0.0
    %582 = vmatprep.subr.mxu0 0.0
    %583 = vmatpush2.msra.mxu0 0.0
    %584 = vmatprep.subr.mxu0 0.0
    %585 = vmatpush2.msra.mxu0 0.0
    %586 = vmatprep.subr.mxu0 0.0
    %587 = vmatpush2.msra.mxu0 0.0
    %588 = vmatprep.subr.mxu0 0.0
    %589 = vmatpush2.msra.mxu0 0.0
    %590 = vmatprep.subr.mxu0 0.0
    %591 = vmatpush2.msra.mxu0 0.0
    %592 = vmatprep.subr.mxu0 0.0
    %593 = vmatpush2.msra.mxu0 0.0
    %594 = vmatprep.subr.mxu0 0.0
    %595 = vmatpush2.msra.mxu0 0.0
    %596 = vmatprep.subr.mxu0 0.0
    %597 = vmatpush2.msra.mxu0 0.0
    %598 = vmatprep.subr.mxu0 0.0
    %599 = vmatpush2.msra.mxu0 0.0
    %600 = vmatprep.mubr.f32.mxu0 0.0
    %601 = vmatmul.mubr.f32.gmra.mxu0 %v534
    %v602 = vpop.f32.mrf.mxu0
    %v603 = vadd.f32 0.0, %v602
    %v604 = vpop.f32.mrf.mxu0
    %605 = vdwg.mxu0
    %v606 = vld [vmem:[%s3 + $0x4] sm:$0x1]
    %v607 = vmul.f32 %v606, %v400
    %v608 = vsel %vm217, %v607, 0.0
    %609 = vadd.xlane.f32.xlu0 %v608
    %v610 = vpop.xlane.xlu0 %609
    %v611 = vrot.slane %v610, 4
    %v612 = vadd.f32 %v610, %v611
    %v613 = vrot.slane %v612, 2
    %v614 = vadd.f32 %v612, %v613
    %v615 = vrot.slane %v614, 1
    %v616 = vadd.f32 %v614, %v615
    %s617 = vtos %v616
    %v618 = vstv %s617
    %s619 = sld [smem:[#allocation2]]
    %v620 = vstv %s619
    %v621 = vadd.f32 %v618, %v620
    %v622 = vmul.f32 %v606, %v603
    %v623 = vsel %vm217, %v622, 0.0
    %624 = vadd.xlane.f32.xlu0 %v623
    %v625 = vpop.xlane.xlu0 %624
    %v626 = vrot.slane %v625, 4
    %v627 = vadd.f32 %v625, %v626
    %v628 = vrot.slane %v627, 2
    %v629 = vadd.f32 %v627, %v628
    %v630 = vrot.slane %v629, 1
    %v631 = vadd.f32 %v629, %v630
    %s632 = vtos %v631
    %v633 = vstv %s632
    %s634 = sld [smem:[#allocation2 + $0x1]]
    %v635 = vstv %s634
    %v636 = vadd.f32 %v633, %v635
    %v637 = vmul.f32 %v606, %v44
    %v638 = vsel %vm217, %v637, 0.0
    %639 = vadd.xlane.f32.xlu0 %v638
    %v640 = vpop.xlane.xlu0 %639
    %v641 = vrot.slane %v640, 4
    %v642 = vadd.f32 %v640, %v641
    %v643 = vrot.slane %v642, 2
    %v644 = vadd.f32 %v642, %v643
    %v645 = vrot.slane %v644, 1
    %v646 = vadd.f32 %v644, %v645
    %s647 = vtos %v646
    %v648 = vstv %s647
    %s649 = sld [smem:[#allocation2 + $0x2]]
    %v650 = vstv %s649
    %v651 = vadd.f32 %v648, %v650
    %v652 = vmax.f32 %v621, %v636
    %v653 = vmax.f32 %v652, %v651
    %v654 = vsub.f32 %v621, %v653
    %v655 = vmul.f32 %v654, 1.442695
    %v656 = vpow.pop %v655
    %v657 = vsub.f32 %v636, %v653
    %v658 = vmul.f32 %v657, 1.442695
    %v659 = vpow.pop %v658
    %v660 = vsub.f32 %v651, %v653
    %v661 = vmul.f32 %v660, 1.442695
    %v662 = vpow.pop %v661
    %v663 = vadd.f32 %v656, %v659
    %v664 = vadd.f32 %v663, %v662
    %v665 = vrcp.pop %v664
    %v666 = vmul.f32 1.0, %v665
    %v667 = vmul.f32 %v662, %v666
    %v668 = vmul.f32 %v667, %v44
    %v669 = vmul.f32 %v656, %v666
    %v670 = vmul.f32 %v669, %v400
    %v671 = vadd.f32 %v668, %v670
    %v672 = vmul.f32 %v659, %v666
    %v673 = vmul.f32 %v672, %v603
    %v674 = vadd.f32 %v671, %v673
    %675 = vst [vmem:[%s4] sm:$0x1] %v674
    // Predicated region
    $region26: #{_forward_impl.1} parent=1 // pred_check
      _
    $region27: #{_forward_impl.1} parent=1 // pred_check_branch
      %677 = sbr.rel (0) target = $region29
    $region28: #{_forward_impl.1} parent=1 // pred_region
      _
    $region29: #{_forward_impl.1} parent=1 // pred_fallthru
      _
    // Predicated region
    $region30: #{_forward_impl.1} parent=1 // pred_check
      _
    $region31: #{_forward_impl.1} parent=1 // pred_check_branch
      %679 = sbr.rel (0) target = $region33
    $region32: #{_forward_impl.1} parent=1 // pred_region
      _
    $region33: #{_forward_impl.1} parent=1 // pred_fallthru
      _
    %680 = vsyncpa [#allocation3], 1
    %681 = vsyncpa [#allocation4], 1

</llo_original>
